<compile_context>
chip_gen: v7x
topology: tpu7x:2x2x1
jax: 0.10.0
libtpu: 0.0.40
codegen_flags: <defaults>
</compile_context>

<pallas_src>
import jax
import jax.numpy as jnp
from jax.experimental import pallas as pl
from jax.experimental.pallas import tpu as pltpu


def _make_adain_kernel(eps, hw):
    eps = float(eps)
    inv_n = 1.0 / float(hw)

    def adain_kernel(x_ref, wb_ref, o_ref):
        # Pass 1: per-row mean over the spatial dim.
        mean = jnp.sum(x_ref[...].astype(jnp.float32), axis=1, keepdims=True)
        mean = mean * inv_n                                   # (rows, 1)

        # Pass 2: centered (two-pass) biased variance. Re-reading x_ref keeps
        # the peak f32 scratch at ~one tile (the re-load hides under HBM DMA).
        d = x_ref[...].astype(jnp.float32) - mean
        var = jnp.sum(d * d, axis=1, keepdims=True) * inv_n   # (rows, 1)
        inv = jax.lax.rsqrt(var + eps)

        wb = wb_ref[...]                                      # (rows, 2) f32
        w = wb[:, 0:1]
        b = wb[:, 1:2]

        # Folded affine: exactly one multiply-add per element in the store pass.
        scale = inv * w
        shift = b - mean * scale
        o_ref[...] = (x_ref[...].astype(jnp.float32) * scale
                      + shift).astype(o_ref.dtype)

    return adain_kernel


def adaptive_instance_norm_2d(x, weight, bias, eps=1e-5):
    """x: (B, C, H, W); weight, bias: (B*C,). Returns (B, C, H, W)."""
    B, C, H, W = x.shape
    BC = B * C
    HW = H * W
    dtype_bytes = jnp.dtype(x.dtype).itemsize

    # Lane-padded footprint (compiler-internal layout) used only for VMEM sizing.
    HWl = pl.cdiv(HW, 128) * 128

    # Sublane packing alignment for the row (instance) axis.
    row_align = 8 if dtype_bytes >= 4 else (16 if dtype_bytes == 2 else 32)

    # Per-generation VMEM budget: ~60% of physical capacity
    # (≈38 MiB on v7x's 64 MiB, ≈77 MiB on v5e/v6e's 128 MiB).
    try:
        vmem_cap = int(pltpu.get_tpu_info().vmem_capacity_bytes)
    except Exception:  # be conservative if the query is unavailable
        vmem_cap = 64 << 20
    budget = (vmem_cap * 3) // 5

    # Per-row VMEM cost: double-buffered input+output tiles, the tiny wb tile,
    # plus ~2 f32 temporaries (upcast / centered copy) worth of headroom.
    per_row = 2 * (2 * HWl * dtype_bytes + 128 * 4) + 2 * HWl * 4
    slack = 2 << 20
    rows_fit = max(int((budget - slack) // per_row), 1)

    if BC <= row_align:
        # Full-extent block on the row axis (exempt from the 8-divisibility rule).
        row_block = BC
    else:
        row_block = max(row_align, (rows_fit // row_align) * row_align)
        # Keep at least 2 grid steps so v7x's two TensorCores both get work.
        half = pl.cdiv(pl.cdiv(BC, 2), row_align) * row_align
        row_block = min(row_block, max(half, row_align))
    # TODO(synk): if even row_block == row_align overflows the VMEM budget
    # (enormous H*W), a second "arbitrary" spatial grid axis with sum/sumsq
    # scratch accumulators is required; typical CNN feature maps fit as-is.

    grid = (pl.cdiv(BC, row_block),)

    # Declare what we actually need; never clamp below the requirement.
    est = row_block * per_row + slack
    vmem_bytes = int(min(max(est, 32 << 20), vmem_cap))

    # 2-D views. x is NOT padded (ragged last row-block handled by masked store;
    # the spatial dim uses the full-array-dim exemption on the lane axis).
    x2d = x.reshape(BC, HW)
    wb = jnp.stack(
        [weight.astype(jnp.float32).reshape(BC),
         bias.astype(jnp.float32).reshape(BC)],
        axis=-1)                                            # (BC, 2) f32
    rows_padded = grid[0] * row_block
    if rows_padded != BC:
        # Tiny pad so weight/bias blocks are never ragged (padded rows are
        # never stored anyway since the x/out blocks mask them).
        wb = jnp.pad(wb, ((0, rows_padded - BC), (0, 0)))

    kernel = _make_adain_kernel(eps, HW)

    out2d = pl.pallas_call(
        kernel,
        out_shape=jax.ShapeDtypeStruct((BC, HW), x.dtype),
        grid_spec=pltpu.PrefetchScalarGridSpec(
            num_scalar_prefetch=0,
            grid=grid,
            in_specs=[
                pl.BlockSpec((row_block, HW), lambda i: (i, 0)),
                pl.BlockSpec((row_block, 2), lambda i: (i, 0)),
            ],
            out_specs=pl.BlockSpec((row_block, HW), lambda i: (i, 0)),
        ),
        compiler_params=pltpu.CompilerParams(
            dimension_semantics=("parallel",),
            vmem_limit_bytes=vmem_bytes,
        ),
    )(x2d, wb)

    return out2d.reshape(B, C, H, W)


def _reference(x, weight, bias, eps=1e-5):
    B, C, H, W = x.shape
    x2d = x.reshape(B * C, H * W).astype(jnp.float32)
    mean = jnp.mean(x2d, axis=1, keepdims=True)
    var = jnp.mean((x2d - mean) ** 2, axis=1, keepdims=True)
    out = (x2d - mean) / jnp.sqrt(var + eps)
    out = out * weight.reshape(-1, 1).astype(jnp.float32) \
        + bias.reshape(-1, 1).astype(jnp.float32)
    return out.reshape(B, C, H, W).astype(x.dtype)


if __name__ == "__main__":
    B, C, H, W = 2, 4, 16, 16
    eps = 1e-5

    key = jax.random.PRNGKey(0)
    kx, kw, kb = jax.random.split(key, 3)
    x = jax.random.normal(kx, (B, C, H, W), dtype=jnp.float32)
    # weight/bias are assigned externally (e.g. by an MLP) in AdaIN usage;
    # initialize them deterministically here with the implied shape (B*C,).
    weight = jax.random.normal(kw, (B * C,), dtype=jnp.float32)
    bias = jax.random.normal(kb, (B * C,), dtype=jnp.float32)

    # TODO(synk): running_mean/running_var momentum EMA buffer updates are a
    # training-side effect of F.batch_norm(training=True) that does not affect
    # the forward output; not emitted.

    out = adaptive_instance_norm_2d(x, weight, bias, eps)
    out = jax.block_until_ready(out)

    ref = _reference(x, weight, bias, eps)
    assert out.shape == (B, C, H, W)
    assert jnp.allclose(out, ref, atol=1e-4, rtol=1e-4)

    print("KERNEL_OK")
</pallas_src>

<mosaic_0001>
module attributes {stable_mosaic.version = 11 : i64} {
  func.func @adain_kernel(%arg0: i32, %arg1: memref<8x256xf32, #tpu.memory_space<vmem>>, %arg2: memref<8x2xf32, #tpu.memory_space<vmem>>, %arg3: memref<8x256xf32, #tpu.memory_space<vmem>>) attributes {dimension_semantics = [#tpu.dimension_semantics<parallel>], iteration_bounds = array<i64: 1>, scalar_prefetch = 0 : i64, scratch_operands = 0 : i64, tpu.core_type = #tpu.core_type<tc>, window_params = [{transform_indices = @transform_0, window_bounds = array<i64: 8, 256>}, {transform_indices = @transform_1, window_bounds = array<i64: 8, 2>}, {transform_indices = @transform_2, window_bounds = array<i64: 8, 256>}]} {
    %c0 = arith.constant 0 : index
    %c0_0 = arith.constant 0 : index
    %0 = vector.load %arg1[%c0, %c0_0] : memref<8x256xf32, #tpu.memory_space<vmem>>, vector<8x256xf32>
    %cst = arith.constant dense<0.000000e+00> : vector<8xf32>
    %1 = vector.multi_reduction <add>, %0, %cst [1] : vector<8x256xf32> to vector<8xf32>
    %2 = vector.shape_cast %1 : vector<8xf32> to vector<8x1xf32>
    %cst_1 = arith.constant 3.906250e-03 : f32
    %3 = vector.broadcast %cst_1 : f32 to vector<8x1xf32>
    %4 = arith.mulf %2, %3 : vector<8x1xf32>
    %c0_2 = arith.constant 0 : index
    %c0_3 = arith.constant 0 : index
    %5 = vector.load %arg1[%c0_2, %c0_3] : memref<8x256xf32, #tpu.memory_space<vmem>>, vector<8x256xf32>
    %6 = vector.broadcast %4 : vector<8x1xf32> to vector<8x256xf32>
    %7 = arith.subf %5, %6 : vector<8x256xf32>
    %8 = arith.mulf %7, %7 : vector<8x256xf32>
    %cst_4 = arith.constant dense<0.000000e+00> : vector<8xf32>
    %9 = vector.multi_reduction <add>, %8, %cst_4 [1] : vector<8x256xf32> to vector<8xf32>
    %10 = vector.shape_cast %9 : vector<8xf32> to vector<8x1xf32>
    %cst_5 = arith.constant 3.906250e-03 : f32
    %11 = vector.broadcast %cst_5 : f32 to vector<8x1xf32>
    %12 = arith.mulf %10, %11 : vector<8x1xf32>
    %cst_6 = arith.constant 9.99999974E-6 : f32
    %13 = vector.broadcast %cst_6 : f32 to vector<8x1xf32>
    %14 = arith.addf %12, %13 : vector<8x1xf32>
    %15 = math.rsqrt %14 : vector<8x1xf32>
    %c0_7 = arith.constant 0 : index
    %c0_8 = arith.constant 0 : index
    %16 = vector.load %arg2[%c0_7, %c0_8] : memref<8x2xf32, #tpu.memory_space<vmem>>, vector<8x2xf32>
    %17 = vector.extract_strided_slice %16 {offsets = [0, 0], sizes = [8, 1], strides = [1, 1]} : vector<8x2xf32> to vector<8x1xf32>
    %18 = vector.extract_strided_slice %16 {offsets = [0, 1], sizes = [8, 1], strides = [1, 1]} : vector<8x2xf32> to vector<8x1xf32>
    %19 = arith.mulf %15, %17 : vector<8x1xf32>
    %20 = arith.mulf %4, %19 : vector<8x1xf32>
    %21 = arith.subf %18, %20 : vector<8x1xf32>
    %c0_9 = arith.constant 0 : index
    %c0_10 = arith.constant 0 : index
    %22 = vector.load %arg1[%c0_9, %c0_10] : memref<8x256xf32, #tpu.memory_space<vmem>>, vector<8x256xf32>
    %23 = vector.broadcast %19 : vector<8x1xf32> to vector<8x256xf32>
    %24 = arith.mulf %22, %23 : vector<8x256xf32>
    %25 = vector.broadcast %21 : vector<8x1xf32> to vector<8x256xf32>
    %26 = arith.addf %24, %25 : vector<8x256xf32>
    %c0_11 = arith.constant 0 : index
    %c0_12 = arith.constant 0 : index
    %27 = vector.load %arg3[%c0_11, %c0_12] : memref<8x256xf32, #tpu.memory_space<vmem>>, vector<8x256xf32>
    tpu.vector_store %arg3[%c0_11, %c0_12], %26 {strides = array<i32>} : memref<8x256xf32, #tpu.memory_space<vmem>>, vector<8x256xf32>,
    return
  }
  func.func @transform_0(%arg0: i32) -> (i32, i32) {
    %c0_i32 = arith.constant 0 : i32
    %c0_i32_0 = arith.constant 0 : i32
    return %arg0, %c0_i32 : i32, i32
  }
  func.func @transform_1(%arg0: i32) -> (i32, i32) {
    %c0_i32 = arith.constant 0 : i32
    %c0_i32_0 = arith.constant 0 : i32
    return %arg0, %c0_i32 : i32, i32
  }
  func.func @transform_2(%arg0: i32) -> (i32, i32) {
    %c0_i32 = arith.constant 0 : i32
    %c0_i32_0 = arith.constant 0 : i32
    return %arg0, %c0_i32 : i32, i32
  }
}

</mosaic_0001>

<llo_original>
// kernel: tpu_custom_call.1
$region0: #{tpu_custom_call.1}
  #allocation0 [shape = 'u32[]', space=smem, size = 0x4, offset = 0x4, fixed_abs, tag = 'smem constant byte address 0x4 - core index']
  #allocation1 [shape = 'u32[144,128]{1,0:T(1,128)}', space=vmem, size = 0x12000, scoped, tag = 'internal scratch']
  %s0 = inlined_call_operand.hbm [shape: f32[8,256], index: 0, kind: input, shape index: {}]
  %s1 = inlined_call_operand.vmem [shape: f32[8,2], index: 1, kind: input, shape index: {}]
  %s2 = inlined_call_operand.hbm [shape: f32[8,256], index: 2, kind: output, shape index: {}]
  %s3 = sld [smem:[#allocation0]]
  $region22: #{tpu_custom_call.1} parent=0
    _
  %s5 = ssub.s32 1, %s3
  %s6 = scalar_select 0, %s5, %s3
  $region1: #{tpu_custom_call.1} parent=0
    #allocation2 [shape = 'u8[8192]{0}', space=vmem, size = 0x2000, scoped, tag = 'input window, operand 0, single buffered']
    #allocation3 [shape = 's32[1]{0}', space=sflag, size = 0x4, scoped, tag = 'scoped memory for tpu_custom_call.1']
    #allocation4 [shape = 's32[1]{0}', space=sflag, size = 0x4, scoped, tag = 'scoped memory for tpu_custom_call.1']
    #allocation5 [shape = 'u8[8192]{0}', space=vmem, size = 0x2000, scoped, tag = 'output window, operand 0, single buffered']
    %7 = vsyncpa [#allocation3], 0
    %8 = vsyncpa [#allocation4], 0
    // Predicated region
    $region2: #{tpu_custom_call.1} parent=1 // pred_check
      _
    $region3: #{tpu_custom_call.1} parent=1 // pred_check_branch
      %10 = sbr.rel (0) target = $region5
    $region4: #{tpu_custom_call.1} parent=1 // pred_region
      %s12 = ssub.s32 256, 256
      %13 = vsyncadd [#allocation3], %s12
      %s15 = sshll.u32 [#allocation2], 4
      %s16 = int_to_ptr.vmem [resolvable:$true] %s15
      %18 = dma.hbm_to_vmem [thread:$0]  %s0, 256, %s16, [#allocation3]
    $region5: #{tpu_custom_call.1} parent=1 // pred_fallthru
      _
    // Predicated region
    $region6: #{tpu_custom_call.1} parent=1 // pred_check
      _
    $region7: #{tpu_custom_call.1} parent=1 // pred_check_branch
      %20 = sbr.rel (0) target = $region9
    $region8: #{tpu_custom_call.1} parent=1 // pred_region
      _
    $region9: #{tpu_custom_call.1} parent=1 // pred_fallthru
      _
    // Predicated region
    $region10: #{tpu_custom_call.1} parent=1 // pred_check
      _
    $region11: #{tpu_custom_call.1} parent=1 // pred_check_branch
      %22 = sbr.rel (0) target = $region13
    $region12: #{tpu_custom_call.1} parent=1 // pred_region
      %23 = dma.done [#allocation3], 256
    $region13: #{tpu_custom_call.1} parent=1 // pred_fallthru
      _
    %v24 = vld [vmem:[#allocation2] sm:$0xff]
    %v25 = vld [vmem:[#allocation2 + $0x8] sm:$0xff]
    %v26 = vadd.f32 %v24, %v25
    %27 = vadd.xlane.f32.xlu0 %v26
    %v28 = vpop.xlane.xlu0 %27
    %v29 = vmul.f32 %v28, 0.00390625
    %v30 = vsub.f32 %v24, %v29
    %v31 = vsub.f32 %v25, %v29
    %v32 = vmul.f32 %v30, %v30
    %v33 = vmul.f32 %v31, %v31
    %v34 = vadd.f32 %v32, %v33
    %35 = vadd.xlane.f32.xlu0 %v34
    %v36 = vpop.xlane.xlu0 %35
    %v37 = vmul.f32 %v36, 0.00390625
    %v38 = vadd.f32 %v37, 1e-05
    %v39 = vrsqrt.pop %v38
    %v40 = vld [vmem:[%s1] sm:$0xff]
    %v41 = vmul.f32 %v39, %v40
    %v42 = vmul.f32 %v29, %v41
    %44 = vrot.lane.b32.xlu0 %v42, 1
    %v45 = vpop.permute.xlu0 %44
    %v47 = vsub.f32 %v40, %v45
    %49 = vset.pattern.permute.xlu0 0
    %50 = vperm.xlu0 %49, %v41
    %v51 = vpop.permute.xlu0 %50
    %v53 = vmul.f32 %v24, %v51
    %v54 = vmul.f32 %v25, %v51
    %56 = vset.pattern.permute.xlu0 1
    %57 = vperm.xlu0 %56, %v47
    %v58 = vpop.permute.xlu0 %57
    %v60 = vadd.f32 %v53, %v58
    %v61 = vadd.f32 %v54, %v58
    %62 = vst [vmem:[#allocation5] sm:$0xff] %v60
    %63 = vst [vmem:[#allocation5 + $0x8] sm:$0xff] %v61
    // Predicated region
    $region14: #{tpu_custom_call.1} parent=1 // pred_check
      _
    $region15: #{tpu_custom_call.1} parent=1 // pred_check_branch
      %65 = sbr.rel (0) target = $region17
    $region16: #{tpu_custom_call.1} parent=1 // pred_region
      %s67 = ssub.s32 256, 256
      %68 = vsyncadd [#allocation4], %s67
      %s70 = sshll.u32 [#allocation5], 4
      %s71 = int_to_ptr.vmem [resolvable:$true] %s70
      %73 = dma.vmem_to_hbm [thread:$0]  %s71, 256, %s2, [#allocation4]
    $region17: #{tpu_custom_call.1} parent=1 // pred_fallthru
      _
    // Predicated region
    $region18: #{tpu_custom_call.1} parent=1 // pred_check
      _
    $region19: #{tpu_custom_call.1} parent=1 // pred_check_branch
      %75 = sbr.rel (0) target = $region21
    $region20: #{tpu_custom_call.1} parent=1 // pred_region
      %76 = dma.done [#allocation4], 256
    $region21: #{tpu_custom_call.1} parent=1 // pred_fallthru
      _
    %77 = vsyncpa [#allocation3], 1
    %78 = vsyncpa [#allocation4], 1

</llo_original>
